<compile_context>
chip_gen: v7x
topology: tpu7x:2x2x1
jax: 0.10.0
libtpu: 0.0.40
codegen_flags: <defaults>
</compile_context>

<pallas_src>
import functools

import jax
import jax.numpy as jnp
from jax.experimental import pallas as pl
from jax.experimental.pallas import tpu as pltpu


def _round_up(x, m):
    return (x + m - 1) // m * m


def _modality_add_kernel(tile_mod_ref, emb_ref, val_ref, out_ref):
    # tile_mod_ref: SMEM (num_tiles,) int32 -- modality slot owning each grid tile.
    # emb_ref:      VMEM (n_entries, 1, wide_D) -- pre-gathered, lane-tiled rows
    #               (resident across the whole grid; constant block index).
    # val_ref:      VMEM (row_tile, wide_D) tile of the packed inputs.
    t = pl.program_id(0)
    m = tile_mod_ref[t]                     # scalar read from SMEM
    row = emb_ref[m]                        # (1, wide_D): leading-axis dynamic index
    out_ref[...] = val_ref[...] + row       # broadcast over row_tile sublanes


@functools.partial(jax.jit, static_argnames=("tile_target_bytes",))
def _fused_add_modality(values, emb_rows, tile_target_bytes=2 * 1024 * 1024):
    """values: tuple of (B_i, S_i, D) arrays; emb_rows: (n_entries, D) gathered rows."""
    n = len(values)
    D = values[0].shape[-1]
    dtype = values[0].dtype
    itemsize = jnp.dtype(dtype).itemsize
    sub = {4: 8, 2: 16, 1: 32}.get(itemsize, 8)     # dtype-aware sublane multiple

    # Lane-densify: fold k consecutive rows into one >=128-lane wide row.
    k = (128 // D) if (D < 128 and 128 % D == 0) else 1
    wide_D = k * D

    # Per-entry flatten / pad-to-k / widen.
    wides, wrs = [], []
    for v in values:
        B, S, _ = v.shape
        rows = B * S
        v2 = v.reshape(rows, D)
        rows_p = _round_up(rows, k)
        if rows_p != rows:
            v2 = jnp.pad(v2, ((0, rows_p - rows), (0, 0)))
        wides.append(v2.reshape(rows_p // k, wide_D))
        wrs.append(rows_p // k)

    # Row tile: ~tile_target_bytes per tile, multiple of `sub`, no larger than
    # the biggest entry needs (avoids massive padding for tiny inputs).
    rt = max(sub, (tile_target_bytes // (wide_D * itemsize)) // sub * sub)
    rt = min(rt, _round_up(max(wrs), sub))

    # Pad each entry to a whole number of tiles, concatenate, build tile->modality map.
    packed, tile_mod = [], []
    for i, (w, wr) in enumerate(zip(wides, wrs)):
        wr_p = _round_up(wr, rt)
        if wr_p != wr:
            w = jnp.pad(w, ((0, wr_p - wr), (0, 0)))
        packed.append(w)
        tile_mod.extend([i] * (wr_p // rt))
    big = jnp.concatenate(packed, axis=0)
    num_tiles = len(tile_mod)
    tile_mod = jnp.asarray(tile_mod, dtype=jnp.int32)

    # Pre-gathered, lane-tiled embedding rows (tiny, full-block resident in VMEM).
    emb_wide = jnp.tile(emb_rows.astype(dtype), (1, k)).reshape(n, 1, wide_D)

    grid_spec = pltpu.PrefetchScalarGridSpec(
        num_scalar_prefetch=1,
        grid=(num_tiles,),
        in_specs=[
            # Whole embedding table; constant block index -> fetched once.
            pl.BlockSpec((n, 1, wide_D), lambda t, mod_ref: (0, 0, 0)),
            # One lane-dense row tile of the packed values per grid step.
            pl.BlockSpec((rt, wide_D), lambda t, mod_ref: (t, 0)),
        ],
        out_specs=pl.BlockSpec((rt, wide_D), lambda t, mod_ref: (t, 0)),
    )

    out_big = pl.pallas_call(
        _modality_add_kernel,
        out_shape=jax.ShapeDtypeStruct(big.shape, dtype),
        grid_spec=grid_spec,
        compiler_params=pltpu.CompilerParams(
            dimension_semantics=("parallel",),      # megacore split on v7x
            vmem_limit_bytes=32 * 1024 * 1024,      # headroom beyond v5e's 16 MiB default
        ),
    )(tile_mod, emb_wide, big)

    # Unpack back to the original per-entry shapes.
    outs, off = [], 0
    for v, wr in zip(values, wrs):
        B, S, _ = v.shape
        rows = B * S
        wr_p = _round_up(wr, rt)
        o = out_big[off:off + wr_p]
        off += wr_p
        o = o[:wr].reshape(wr * k, D)[:rows].reshape(B, S, D)
        outs.append(o)
    return tuple(outs)


class ModalityEmbedding:
    """JAX/Pallas port of the PyTorch ModalityEmbedding module (forward only)."""

    def __init__(self, num_modality, d_model, key):
        # torch.nn.Embedding default init ~ N(0, 1); deterministic via PRNGKey.
        self.weight = jax.random.normal(key, (num_modality, d_model),
                                        dtype=jnp.float32)

    def __call__(self, remain_dict):
        keys = list(remain_dict.keys())
        values = tuple(remain_dict[k] for k in keys)
        # nn.Embedding lookup == row gather; done in the wrapper (plain XLA),
        # the Pallas kernel does the fused broadcast-add for all modalities.
        mod_idx = jnp.arange(len(keys), dtype=jnp.int32)
        emb_rows = jnp.take(self.weight, mod_idx, axis=0)
        outs = _fused_add_modality(values, emb_rows)
        return dict(zip(keys, outs))


if __name__ == "__main__":
    key = jax.random.PRNGKey(0)
    k_emb, k_a, k_b, k_c = jax.random.split(key, 4)

    num_modality = 3
    d_model = 32
    B, S = 2, 8

    module = ModalityEmbedding(num_modality, d_model, k_emb)

    remain_dict = {
        "img": jax.random.normal(k_a, (B, S, d_model), dtype=jnp.float32),
        "ts": jax.random.normal(k_b, (B, S, d_model), dtype=jnp.float32),
        "text": jax.random.normal(k_c, (B, S, d_model), dtype=jnp.float32),
    }

    out = module(remain_dict)
    out = jax.tree_util.tree_map(jax.block_until_ready, out)

    # Reference check (plain JAX) of the broadcast-add semantics.
    for midx, (k, v) in enumerate(remain_dict.items()):
        ref = v + module.weight[midx][None, None, :]
        assert jnp.allclose(out[k], ref, atol=1e-6), f"mismatch for {k}"

    print("KERNEL_OK")
</pallas_src>

<mosaic_0001>
module attributes {stable_mosaic.version = 11 : i64} {
  func.func @_modality_add_kernel(%arg0: i32, %arg1: memref<3xi32, #tpu.memory_space<smem>>, %arg2: memref<3x1x128xf32, #tpu.memory_space<vmem>>, %arg3: memref<8x128xf32, #tpu.memory_space<vmem>>, %arg4: memref<8x128xf32, #tpu.memory_space<vmem>>) attributes {dimension_semantics = [#tpu.dimension_semantics<parallel>], iteration_bounds = array<i64: 3>, scalar_prefetch = 1 : i64, scratch_operands = 0 : i64, tpu.core_type = #tpu.core_type<tc>, window_params = [{pipeline_mode = #tpu.pipeline_mode<synchronous>, transform_indices = @transform_0, window_bounds = array<i64: 3, 1, 128>}, {transform_indices = @transform_1, window_bounds = array<i64: 8, 128>}, {transform_indices = @transform_2, window_bounds = array<i64: 8, 128>}]} {
    %0 = arith.index_cast %arg0 : i32 to index
    %1 = memref.load %arg1[%0] : memref<3xi32, #tpu.memory_space<smem>>
    %2 = arith.index_cast %1 : i32 to index
    %c0 = arith.constant 0 : index
    %c0_0 = arith.constant 0 : index
    %3 = vector.load %arg2[%2, %c0, %c0_0] : memref<3x1x128xf32, #tpu.memory_space<vmem>>, vector<1x1x128xf32>
    %4 = vector.shape_cast %3 : vector<1x1x128xf32> to vector<1x128xf32>
    %c0_1 = arith.constant 0 : index
    %c0_2 = arith.constant 0 : index
    %5 = vector.load %arg3[%c0_1, %c0_2] : memref<8x128xf32, #tpu.memory_space<vmem>>, vector<8x128xf32>
    %6 = vector.broadcast %4 : vector<1x128xf32> to vector<8x128xf32>
    %7 = arith.addf %5, %6 : vector<8x128xf32>
    %c0_3 = arith.constant 0 : index
    %c0_4 = arith.constant 0 : index
    %8 = vector.load %arg4[%c0_3, %c0_4] : memref<8x128xf32, #tpu.memory_space<vmem>>, vector<8x128xf32>
    tpu.vector_store %arg4[%c0_3, %c0_4], %7 {strides = array<i32>} : memref<8x128xf32, #tpu.memory_space<vmem>>, vector<8x128xf32>,
    return
  }
  func.func @transform_0(%arg0: i32, %arg1: memref<3xi32, #tpu.memory_space<smem>>) -> (i32, i32, i32) {
    %c0_i32 = arith.constant 0 : i32
    %c0_i32_0 = arith.constant 0 : i32
    %c0_i32_1 = arith.constant 0 : i32
    %c0_i32_2 = arith.constant 0 : i32
    return %c0_i32, %c0_i32_0, %c0_i32_1 : i32, i32, i32
  }
  func.func @transform_1(%arg0: i32, %arg1: memref<3xi32, #tpu.memory_space<smem>>) -> (i32, i32) {
    %c0_i32 = arith.constant 0 : i32
    %c0_i32_0 = arith.constant 0 : i32
    return %arg0, %c0_i32 : i32, i32
  }
  func.func @transform_2(%arg0: i32, %arg1: memref<3xi32, #tpu.memory_space<smem>>) -> (i32, i32) {
    %c0_i32 = arith.constant 0 : i32
    %c0_i32_0 = arith.constant 0 : i32
    return %arg0, %c0_i32 : i32, i32
  }
}

</mosaic_0001>

<llo_original>
// kernel: _fused_add_modality.1
$region0: #{_fused_add_modality.1}
  #allocation0 [shape = 'u32[]', space=smem, size = 0x4, offset = 0x4, fixed_abs, tag = 'smem constant byte address 0x4 - core index']
  #allocation1 [shape = 'u32[144,128]{1,0:T(1,128)}', space=vmem, size = 0x12000, scoped, tag = 'internal scratch']
  #allocation2 [shape = 's32[1]{0}', space=sflag, size = 0x4, scoped, tag = 'scoped memory for _fused_add_modality.1']
  #allocation3 [shape = 'u8[512]{0}', space=smem, size = 0x200, scoped, tag = 'prefetched SMEM operand 0']
  %s0 = inlined_call_operand.vmem [shape: s32[3], index: 0, kind: input, shape index: {}]
  %s1 = inlined_call_operand.vmem [shape: f32[3,1,128], index: 1, kind: input, shape index: {}]
  %s2 = inlined_call_operand.vmem [shape: f32[24,128], index: 2, kind: input, shape index: {}]
  %s3 = inlined_call_operand.vmem [shape: f32[24,128], index: 3, kind: output, shape index: {}]
  %s4 = sld [smem:[#allocation0]]
  $region41: #{_fused_add_modality.1} parent=0
    _
  %s6 = ssub.s32 1, %s4
  %s7 = scalar_select 0, %s6, %s4
  %s8 = sshll.u32 %s0, 4
  %s9 = int_to_ptr.vmem [resolvable:$true] %s8
  %11 = dma.vmem_to_smem %s9, 16, [#allocation3], [#allocation2]
  %12 = dma.done [#allocation2], 16
  %13 = sfence
  loop: start=0, step=1, limit=5
  $region2: #{_fused_add_modality.1} parent=0 // loop_pre_header
    _
  $region3: #{_fused_add_modality.1} parent=0 // loop_header
    %s15 = sphi 0, %s19
    %p16 = scmp.ge.s32.totalorder %s15, 5
    %s23 = sphi 0, %s23
    %s25 = sphi 0, %s23
    %s26 = sphi 0, %s25
    %s40 = sphi 0, %s26
    %s46 = sphi 0, %s48
    %s49 = sphi 0, %s46
    %s50 = sphi 0, %s49
    %s66 = sphi 0, %s50
    %s72 = sphi 0, %s74
    %s75 = sphi 0, %s72
    %s76 = sphi 0, %s75
    %s92 = sphi 0, %s76
  $region4: #{_fused_add_modality.1} parent=0 // loop_header_branch
    %18 = sbr.rel (%p16) target = $region8
  $region5: #{_fused_add_modality.1} parent=0 // loop_body
    %s20 = ssub.s32 %s15, 1
    %s21 = ssub.s32 %s15, 2
    %s22 = sadd.s32 %s15, 1
    %s24 = sadd.s32 %s23, 1
    %p27 = scmp.eq.s32.totalorder %s15, 2
    %p28 = scmp.ne.s32.totalorder %s23, %s25
    %p29 = scmp.eq.s32.totalorder %s15, 0
    %p30 = por %p28, %p29
    %p31 = scmp.ne.s32.totalorder %s23, %s25
    %p32 = scmp.eq.s32.totalorder %s20, 2
    %p33 = por %p31, %p32
    %p34 = scmp.ne.s32.totalorder %s25, %s26
    %p35 = scmp.eq.s32.totalorder %s20, 0
    %p36 = por %p34, %p35
    %p37 = scmp.ne.s32.totalorder %s25, %s26
    %p38 = scmp.eq.s32.totalorder %s21, 2
    %p39 = por %p37, %p38
    %p41 = scmp.ne.s32.totalorder %s26, %s40
    %p42 = scmp.eq.s32.totalorder %s21, 0
    %p43 = por %p41, %p42
    %s44 = ssub.s32 %s15, %s22
    %p45 = scmp.eq.s32.totalorder %s44, 0
    %s47 = sadd.s32 %s46, 1
    %s48 = scalar_select %p45, %s46, %s47
    %p51 = pneg %p45
    %p52 = scmp.eq.s32.totalorder %s15, 2
    %p53 = por %p51, %p52
    %p54 = scmp.ne.s32.totalorder %s46, %s49
    %p55 = scmp.eq.s32.totalorder %s15, 0
    %p56 = por %p54, %p55
    %p57 = scmp.ne.s32.totalorder %s46, %s49
    %p58 = scmp.eq.s32.totalorder %s20, 2
    %p59 = por %p57, %p58
    %p60 = scmp.ne.s32.totalorder %s49, %s50
    %p61 = scmp.eq.s32.totalorder %s20, 0
    %p62 = por %p60, %p61
    %p63 = scmp.ne.s32.totalorder %s49, %s50
    %p64 = scmp.eq.s32.totalorder %s21, 2
    %p65 = por %p63, %p64
    %p67 = scmp.ne.s32.totalorder %s50, %s66
    %p68 = scmp.eq.s32.totalorder %s21, 0
    %p69 = por %p67, %p68
    %s70 = ssub.s32 %s15, %s22
    %p71 = scmp.eq.s32.totalorder %s70, 0
    %s73 = sadd.s32 %s72, 1
    %s74 = scalar_select %p71, %s72, %s73
    %p77 = pneg %p71
    %p78 = scmp.eq.s32.totalorder %s15, 2
    %p79 = por %p77, %p78
    %p80 = scmp.ne.s32.totalorder %s72, %s75
    %p81 = scmp.eq.s32.totalorder %s15, 0
    %p82 = por %p80, %p81
    %p83 = scmp.ne.s32.totalorder %s72, %s75
    %p84 = scmp.eq.s32.totalorder %s20, 2
    %p85 = por %p83, %p84
    %p86 = scmp.ne.s32.totalorder %s75, %s76
    %p87 = scmp.eq.s32.totalorder %s20, 0
    %p88 = por %p86, %p87
    %p89 = scmp.ne.s32.totalorder %s75, %s76
    %p90 = scmp.eq.s32.totalorder %s21, 2
    %p91 = por %p89, %p90
    %p93 = scmp.ne.s32.totalorder %s76, %s92
    %p94 = scmp.eq.s32.totalorder %s21, 0
    %p95 = por %p93, %p94
    %p96 = scmp.le.s32.totalorder 1, %s15
    %p97 = scmp.lt.s32.totalorder %s15, 4
    %p98 = pnand %p96, %p97
    %p99 = pneg %p98
    // Predicated region
    $region9: #{_fused_add_modality.1} parent=5 // pred_check
      _
    $region10: #{_fused_add_modality.1} parent=5 // pred_check_branch
      %101 = sbr.rel (%p98) target = $region12
    $region11: #{_fused_add_modality.1} parent=5 // pred_region
      %s102 = ssub.s32 %s15, 1
      // Predicated region
      $region13: #{_fused_add_modality.1} parent=11 // pred_check
        %p103 = pneg %p36
      $region14: #{_fused_add_modality.1} parent=11 // pred_check_branch
        %105 = sbr.rel (%p103) target = $region16
      $region15: #{_fused_add_modality.1} parent=11 // pred_region
        _
      $region16: #{_fused_add_modality.1} parent=11 // pred_fallthru
        _
    $region12: #{_fused_add_modality.1} parent=5 // pred_fallthru
      _
    %p106 = scmp.lt.s32.totalorder %s15, 3
    // Predicated region
    $region17: #{_fused_add_modality.1} parent=5 // pred_check
      %p107 = pneg %p106
    $region18: #{_fused_add_modality.1} parent=5 // pred_check_branch
      %109 = sbr.rel (%p107) target = $region20
    $region19: #{_fused_add_modality.1} parent=5 // pred_region
      // Predicated region
      $region21: #{_fused_add_modality.1} parent=19 // pred_check
        %p110 = pneg %p56
      $region22: #{_fused_add_modality.1} parent=19 // pred_check_branch
        %112 = sbr.rel (%p110) target = $region24
      $region23: #{_fused_add_modality.1} parent=19 // pred_region
        %p113 = scmp.lt.s32.totalorder %s15, 2
        %s114 = scalar_select %p113, %s15, 2
        %s115 = smul.addr %s114, 8
        %s116 = scalar_lea.vmem %s2, %s115
      $region24: #{_fused_add_modality.1} parent=19 // pred_fallthru
        _
    $region20: #{_fused_add_modality.1} parent=5 // pred_fallthru
      _
    %p117 = scmp.le.s32.totalorder 1, %s15
    %p118 = scmp.lt.s32.totalorder %s15, 4
    %p119 = pnand %p117, %p118
    %p120 = pneg %p119
    // Predicated region
    $region25: #{_fused_add_modality.1} parent=5 // pred_check
      _
    $region26: #{_fused_add_modality.1} parent=5 // pred_check_branch
      %122 = sbr.rel (%p119) target = $region28
    $region27: #{_fused_add_modality.1} parent=5 // pred_region
      %s123 = ssub.s32 %s15, 1
      %p124 = pneg %p36
      %p125 = pneg %p33
      %p126 = scmp.lt.s32.totalorder %s20, 2
      %s127 = scalar_select %p126, %s20, 2
      %s128 = smul.addr %s127, 8
      %s129 = scalar_lea.vmem %s2, %s128
      %p130 = pneg %p62
      %p131 = pneg %p59
      %p132 = pneg %p88
      %p133 = pneg %p85
      %p134 = scmp.lt.s32.totalorder %s20, 2
      %s135 = scalar_select %p134, %s20, 2
      %s136 = smul.addr %s135, 8
      %s137 = scalar_lea.vmem %s3, %s136
      %p138 = scmp.lt.s32.totalorder %s20, 2
      %s139 = scalar_select %p138, %s20, 2
      %s140 = smul.addr %s139, 8
      %s141 = scalar_lea.vmem %s2, %s140
      %p142 = scmp.lt.s32.totalorder %s20, 2
      %s143 = scalar_select %p142, %s20, 2
      %s144 = smul.addr %s143, 8
      %s145 = scalar_lea.vmem %s3, %s144
      %s146 = sld [smem:[#allocation3 + %s20]]
      %s147 = scalar_lea.vmem %s1, %s146
      %v148 = vld [vmem:[%s147] sm:$0x1]
      %v149 = vld [vmem:[%s141] sm:$0xff]
      %v151 = vlaneseq
      %v152 = vshrl.u32 %v151, 7
      %v153 = vsub.s32 0, %v152
      %v154 = vrot.slane %v148, %v153
      %v156 = vadd.f32 %v149, %v154
      %157 = vst [vmem:[%s145] sm:$0xff] %v156
      %p158 = scmp.lt.s32.totalorder %s20, 2
      %s159 = scalar_select %p158, %s20, 2
      %s160 = smul.addr %s159, 8
      %s161 = scalar_lea.vmem %s3, %s160
      // Predicated region
      $region29: #{_fused_add_modality.1} parent=27 // pred_check
        %p162 = pneg %p85
      $region30: #{_fused_add_modality.1} parent=27 // pred_check_branch
        %164 = sbr.rel (%p162) target = $region32
      $region31: #{_fused_add_modality.1} parent=27 // pred_region
        _
      $region32: #{_fused_add_modality.1} parent=27 // pred_fallthru
        _
    $region28: #{_fused_add_modality.1} parent=5 // pred_fallthru
      _
    %p165 = scmp.le.s32.totalorder 2, %s15
    // Predicated region
    $region33: #{_fused_add_modality.1} parent=5 // pred_check
      %p166 = pneg %p165
    $region34: #{_fused_add_modality.1} parent=5 // pred_check_branch
      %168 = sbr.rel (%p166) target = $region36
    $region35: #{_fused_add_modality.1} parent=5 // pred_region
      %s169 = ssub.s32 %s15, 2
      // Predicated region
      $region37: #{_fused_add_modality.1} parent=35 // pred_check
        %p170 = pneg %p91
      $region38: #{_fused_add_modality.1} parent=35 // pred_check_branch
        %172 = sbr.rel (%p170) target = $region40
      $region39: #{_fused_add_modality.1} parent=35 // pred_region
        %p173 = scmp.lt.s32.totalorder %s21, 2
        %s174 = scalar_select %p173, %s21, 2
        %s175 = smul.addr %s174, 8
        %s176 = scalar_lea.vmem %s3, %s175
      $region40: #{_fused_add_modality.1} parent=35 // pred_fallthru
        _
    $region36: #{_fused_add_modality.1} parent=5 // pred_fallthru
      _
  $region6: #{_fused_add_modality.1} parent=0 // loop_footer
    %s19 = sadd.s32 1, %s15
  $region7: #{_fused_add_modality.1} parent=0 // loop_footer_branch
    %14 = sbr.rel target = $region3
  $region8: #{_fused_add_modality.1} parent=0 // loop_exit
    _

</llo_original>
